<compile_context>
chip_gen: v6e
topology: v6e:2x2x1
jax: 0.10.0
libtpu: 0.0.40
codegen_flags: <defaults>
</compile_context>

<pallas_src>
import functools

import jax
import jax.numpy as jnp
from jax.experimental import pallas as pl
from jax.experimental.pallas import tpu as pltpu


def _round_up(n, m):
    return ((n + m - 1) // m) * m


def _cdiv(a, b):
    return (a + b - 1) // b


def _elu(x):
    # F.elu(alpha=1.0). Both branches of where() are evaluated, but
    # exp(large)=inf is discarded by the select (no NaN), and the exp(x)-1
    # cancellation near 0 is ~1e-7 abs -- inside the 1e-5 tolerance.
    # Keeps the VALU path to one cmp + one select; exp goes to the EUP slot.
    return jnp.where(x > 0, x, jnp.exp(x) - 1.0)


def lineard_kernel(x_ref, w1_ref, b1_ref, w2_ref, b2_ref, w3_ref, b3_ref, o_ref):
    """One batch tile of the fused 3-layer MLP forward.

    x arrives with its logical (unpadded) feature width; hidden/output feature
    dims are pre-padded to multiples of 128 so inter-layer activations and the
    output store are lane-dense. Matmuls hit the MXU with f32 accumulation;
    exp / tanh land in the EUP slot.
    """
    h = jnp.dot(x_ref[...], w1_ref[...], preferred_element_type=jnp.float32) + b1_ref[...]
    h = _elu(h)
    h = jnp.dot(h, w2_ref[...], preferred_element_type=jnp.float32) + b2_ref[...]
    h = _elu(h)
    h = jnp.dot(h, w3_ref[...], preferred_element_type=jnp.float32) + b3_ref[...]
    # sigmoid(h) == 0.5*tanh(0.5*h) + 0.5: a single EUP op instead of
    # exp + exact reciprocal (whose Newton refinement lands in the VALU slot).
    o_ref[...] = (0.5 * jnp.tanh(0.5 * h) + 0.5).astype(o_ref.dtype)


def init_params(key, input_size, hidden_size, output_size):
    """Deterministic init mirroring nn.Linear (weight stored transposed (in, out))."""
    k1, k2, k3, k4, k5, k6 = jax.random.split(key, 6)
    s1 = 1.0 / jnp.sqrt(input_size)
    s2 = 1.0 / jnp.sqrt(hidden_size)
    return {
        "w1": jax.random.uniform(k1, (input_size, hidden_size), jnp.float32, -s1, s1),
        "b1": jax.random.uniform(k2, (1, hidden_size), jnp.float32, -s1, s1),
        "w2": jax.random.uniform(k3, (hidden_size, hidden_size), jnp.float32, -s2, s2),
        "b2": jax.random.uniform(k4, (1, hidden_size), jnp.float32, -s2, s2),
        "w3": jax.random.uniform(k5, (hidden_size, output_size), jnp.float32, -s2, s2),
        "b3": jax.random.uniform(k6, (1, output_size), jnp.float32, -s2, s2),
    }


def pad_params(params):
    """Zero-pad hidden/output feature dims to multiples of 128. Done ONCE, reused.

    w1 rows stay UNPADDED so x can stream with its logical feature width.
    Zero padding is semantics-preserving: padded hidden columns get bias 0 ->
    elu(0)=0 -> multiplied by zero weight rows downstream; padded output
    columns (sigmoid(0)=0.5) are sliced off before returning.
    (Cast these to bfloat16 for v6e/v7x MXU throughput if tolerance >= ~1e-3.)
    """
    d_in, hid = params["w1"].shape
    d_out = params["w3"].shape[1]
    h_p = _round_up(hid, 128)
    d_out_p = _round_up(d_out, 128)

    def pad2(a, rows, cols):
        return jnp.pad(a, ((0, rows - a.shape[0]), (0, cols - a.shape[1])))

    return {
        "w1": pad2(params["w1"], d_in, h_p),     # rows unpadded
        "b1": pad2(params["b1"], 1, h_p),
        "w2": pad2(params["w2"], h_p, h_p),
        "b2": pad2(params["b2"], 1, h_p),
        "w3": pad2(params["w3"], h_p, d_out_p),
        "b3": pad2(params["b3"], 1, d_out_p),
    }


def _choose_batch_tile(B, tile_b):
    """Batch tile: big enough to amortize the ~0.35us/step overhead, small
    enough to (a) not over-pad the batch and (b) leave >=2 grid steps for v7x
    megacore whenever the batch is worth splitting."""
    n_steps = max(1, _cdiv(B, tile_b))
    if n_steps == 1 and B > 8:
        n_steps = 2  # keep both v7x TensorCores busy (harmless on v5e/v6e)
    return _round_up(_cdiv(B, n_steps), 8)


@functools.partial(jax.jit, static_argnames=("output_size", "tile_b"))
def lineard_forward(x, pparams, output_size, tile_b=2048):
    """x: [B, input_size] f32; pparams: lane-padded params from pad_params()."""
    B, d_in = x.shape
    assert pparams["w1"].shape[0] == d_in, "pparams must come from pad_params()"
    h_p = pparams["w1"].shape[1]
    d_out_p = pparams["w3"].shape[1]

    tb = _choose_batch_tile(B, tile_b)
    b_pad = _round_up(B, tb)
    x_p = x if b_pad == B else jnp.pad(x, ((0, b_pad - B), (0, 0)))

    # VMEM budget: single-buffered resident f32 weights (Buffered(1)) +
    # double-buffered streaming x/out tiles + headroom for activations.
    w_bytes = 4 * (d_in * h_p + h_p * h_p + h_p * d_out_p + 2 * h_p + d_out_p)
    io_bytes = 4 * 2 * tb * (d_in + d_out_p)
    act_bytes = 4 * 2 * tb * h_p
    vmem_limit = min(max(int(1.5 * (w_bytes + io_bytes + act_bytes)) + (8 << 20),
                         32 << 20), 100 << 20)
    # TODO(synk): for hidden sizes where resident weights exceed v7x's 64 MiB
    # VMEM even single-buffered, add a grid axis over the hidden dim of w2/w3
    # with an f32 accumulator scratch instead of keeping all weights resident.

    const = lambda i: (0, 0)  # same block every step -> VMEM-resident weights

    def resident(shape):
        # Constant-index blocks need no double buffer.
        return pl.BlockSpec(shape, const, pipeline_mode=pl.Buffered(1))

    out = pl.pallas_call(
        lineard_kernel,
        out_shape=jax.ShapeDtypeStruct((b_pad, d_out_p), jnp.float32),
        grid=(b_pad // tb,),
        in_specs=[
            # x streamed per batch tile; full-dim feature block (exempt from
            # the 128 rule) -> no wrapper-side feature padding / extra HBM pass.
            pl.BlockSpec((tb, d_in), lambda i: (i, 0)),
            resident((d_in, h_p)),      # w1
            resident((1, h_p)),         # b1
            resident((h_p, h_p)),       # w2
            resident((1, h_p)),         # b2
            resident((h_p, d_out_p)),   # w3
            resident((1, d_out_p)),     # b3
        ],
        out_specs=pl.BlockSpec((tb, d_out_p), lambda i: (i, 0)),  # lane-dense store
        compiler_params=pltpu.CompilerParams(
            dimension_semantics=("parallel",),
            vmem_limit_bytes=vmem_limit,
        ),
    )(x_p, pparams["w1"], pparams["b1"], pparams["w2"], pparams["b2"],
      pparams["w3"], pparams["b3"])

    # TODO(synk): consumers that can fuse/alias should take the padded
    # (b_pad, d_out_p) array directly and skip this extra HBM pass
    # (dead columns hold sigmoid(0)=0.5).
    if b_pad != B or d_out_p != output_size:
        out = out[:B, :output_size]
    return out


def lineard_reference(x, params):
    """Pure-JAX reference on the unpadded params."""
    h = jax.nn.elu(x @ params["w1"] + params["b1"])
    h = jax.nn.elu(h @ params["w2"] + params["b2"])
    return jax.nn.sigmoid(h @ params["w3"] + params["b3"])


if __name__ == "__main__":
    input_size, hidden_size, output_size = 16, 32, 8
    batch = 8

    key = jax.random.PRNGKey(0)
    kx, kp = jax.random.split(key)
    x = jax.random.normal(kx, (batch, input_size), jnp.float32)
    params = init_params(kp, input_size, hidden_size, output_size)
    pparams = pad_params(params)  # pad once; reuse for every forward call

    out = lineard_forward(x, pparams, output_size)
    out = jax.block_until_ready(out)

    ref = lineard_reference(x, params)
    assert out.shape == (batch, output_size)
    assert jnp.allclose(out, ref, atol=1e-5, rtol=1e-5), "mismatch vs reference"

    print("KERNEL_OK")
</pallas_src>

<mosaic_0001>
module attributes {stable_mosaic.version = 11 : i64} {
  func.func @lineard_kernel(%arg0: i32, %arg1: memref<8x16xf32, #tpu.memory_space<vmem>>, %arg2: memref<16x128xf32, #tpu.memory_space<vmem>>, %arg3: memref<1x128xf32, #tpu.memory_space<vmem>>, %arg4: memref<128x128xf32, #tpu.memory_space<vmem>>, %arg5: memref<1x128xf32, #tpu.memory_space<vmem>>, %arg6: memref<128x128xf32, #tpu.memory_space<vmem>>, %arg7: memref<1x128xf32, #tpu.memory_space<vmem>>, %arg8: memref<8x128xf32, #tpu.memory_space<vmem>>) attributes {dimension_semantics = [#tpu.dimension_semantics<parallel>], iteration_bounds = array<i64: 1>, scalar_prefetch = 0 : i64, scratch_operands = 0 : i64, tpu.core_type = #tpu.core_type<tc>, window_params = [{transform_indices = @transform_0, window_bounds = array<i64: 8, 16>}, {pipeline_mode = #tpu.pipeline_mode<synchronous>, transform_indices = @transform_1, window_bounds = array<i64: 16, 128>}, {pipeline_mode = #tpu.pipeline_mode<synchronous>, transform_indices = @transform_2, window_bounds = array<i64: 1, 128>}, {pipeline_mode = #tpu.pipeline_mode<synchronous>, transform_indices = @transform_3, window_bounds = array<i64: 128, 128>}, {pipeline_mode = #tpu.pipeline_mode<synchronous>, transform_indices = @transform_4, window_bounds = array<i64: 1, 128>}, {pipeline_mode = #tpu.pipeline_mode<synchronous>, transform_indices = @transform_5, window_bounds = array<i64: 128, 128>}, {pipeline_mode = #tpu.pipeline_mode<synchronous>, transform_indices = @transform_6, window_bounds = array<i64: 1, 128>}, {transform_indices = @transform_7, window_bounds = array<i64: 8, 128>}]} {
    %c0 = arith.constant 0 : index
    %c0_0 = arith.constant 0 : index
    %0 = vector.load %arg1[%c0, %c0_0] : memref<8x16xf32, #tpu.memory_space<vmem>>, vector<8x16xf32>
    %c0_1 = arith.constant 0 : index
    %c0_2 = arith.constant 0 : index
    %1 = vector.load %arg2[%c0_1, %c0_2] : memref<16x128xf32, #tpu.memory_space<vmem>>, vector<16x128xf32>
    %cst = arith.constant dense<0.000000e+00> : vector<8x128xf32>
    %2 = tpu.matmul %0, %1, %cst {dimension_numbers = #tpu.dot_dimension_numbers<[1], [0], [0], [1], [0, 0, 1, 1], [], []>} : vector<8x16xf32>, vector<16x128xf32>, vector<8x128xf32> -> vector<8x128xf32>
    %c0_3 = arith.constant 0 : index
    %c0_4 = arith.constant 0 : index
    %3 = vector.load %arg3[%c0_3, %c0_4] : memref<1x128xf32, #tpu.memory_space<vmem>>, vector<1x128xf32>
    %4 = vector.broadcast %3 : vector<1x128xf32> to vector<8x128xf32>
    %5 = arith.addf %2, %4 : vector<8x128xf32>
    %cst_5 = arith.constant 0.000000e+00 : f32
    %6 = vector.broadcast %cst_5 : f32 to vector<8x128xf32>
    %7 = arith.cmpf ogt, %5, %6 : vector<8x128xf32>
    %8 = math.exp %5 : vector<8x128xf32>
    %cst_6 = arith.constant 1.000000e+00 : f32
    %9 = vector.broadcast %cst_6 : f32 to vector<8x128xf32>
    %10 = arith.subf %8, %9 : vector<8x128xf32>
    %11 = arith.select %7, %5, %10 : vector<8x128xi1>, vector<8x128xf32>
    %c0_7 = arith.constant 0 : index
    %c0_8 = arith.constant 0 : index
    %12 = vector.load %arg4[%c0_7, %c0_8] : memref<128x128xf32, #tpu.memory_space<vmem>>, vector<128x128xf32>
    %cst_9 = arith.constant dense<0.000000e+00> : vector<8x128xf32>
    %13 = tpu.matmul %11, %12, %cst_9 {dimension_numbers = #tpu.dot_dimension_numbers<[1], [0], [0], [1], [0, 0, 1, 1], [], []>} : vector<8x128xf32>, vector<128x128xf32>, vector<8x128xf32> -> vector<8x128xf32>
    %c0_10 = arith.constant 0 : index
    %c0_11 = arith.constant 0 : index
    %14 = vector.load %arg5[%c0_10, %c0_11] : memref<1x128xf32, #tpu.memory_space<vmem>>, vector<1x128xf32>
    %15 = vector.broadcast %14 : vector<1x128xf32> to vector<8x128xf32>
    %16 = arith.addf %13, %15 : vector<8x128xf32>
    %cst_12 = arith.constant 0.000000e+00 : f32
    %17 = vector.broadcast %cst_12 : f32 to vector<8x128xf32>
    %18 = arith.cmpf ogt, %16, %17 : vector<8x128xf32>
    %19 = math.exp %16 : vector<8x128xf32>
    %cst_13 = arith.constant 1.000000e+00 : f32
    %20 = vector.broadcast %cst_13 : f32 to vector<8x128xf32>
    %21 = arith.subf %19, %20 : vector<8x128xf32>
    %22 = arith.select %18, %16, %21 : vector<8x128xi1>, vector<8x128xf32>
    %c0_14 = arith.constant 0 : index
    %c0_15 = arith.constant 0 : index
    %23 = vector.load %arg6[%c0_14, %c0_15] : memref<128x128xf32, #tpu.memory_space<vmem>>, vector<128x128xf32>
    %cst_16 = arith.constant dense<0.000000e+00> : vector<8x128xf32>
    %24 = tpu.matmul %22, %23, %cst_16 {dimension_numbers = #tpu.dot_dimension_numbers<[1], [0], [0], [1], [0, 0, 1, 1], [], []>} : vector<8x128xf32>, vector<128x128xf32>, vector<8x128xf32> -> vector<8x128xf32>
    %c0_17 = arith.constant 0 : index
    %c0_18 = arith.constant 0 : index
    %25 = vector.load %arg7[%c0_17, %c0_18] : memref<1x128xf32, #tpu.memory_space<vmem>>, vector<1x128xf32>
    %26 = vector.broadcast %25 : vector<1x128xf32> to vector<8x128xf32>
    %27 = arith.addf %24, %26 : vector<8x128xf32>
    %cst_19 = arith.constant 5.000000e-01 : f32
    %28 = vector.broadcast %cst_19 : f32 to vector<8x128xf32>
    %29 = arith.mulf %28, %27 : vector<8x128xf32>
    %30 = math.tanh %29 : vector<8x128xf32>
    %cst_20 = arith.constant 5.000000e-01 : f32
    %31 = vector.broadcast %cst_20 : f32 to vector<8x128xf32>
    %32 = arith.mulf %31, %30 : vector<8x128xf32>
    %cst_21 = arith.constant 5.000000e-01 : f32
    %33 = vector.broadcast %cst_21 : f32 to vector<8x128xf32>
    %34 = arith.addf %32, %33 : vector<8x128xf32>
    %c0_22 = arith.constant 0 : index
    %c0_23 = arith.constant 0 : index
    %35 = vector.load %arg8[%c0_22, %c0_23] : memref<8x128xf32, #tpu.memory_space<vmem>>, vector<8x128xf32>
    tpu.vector_store %arg8[%c0_22, %c0_23], %34 {strides = array<i32>} : memref<8x128xf32, #tpu.memory_space<vmem>>, vector<8x128xf32>,
    return
  }
  func.func @transform_0(%arg0: i32) -> (i32, i32) {
    %c0_i32 = arith.constant 0 : i32
    %c0_i32_0 = arith.constant 0 : i32
    return %arg0, %c0_i32 : i32, i32
  }
  func.func @transform_1(%arg0: i32) -> (i32, i32) {
    %c0_i32 = arith.constant 0 : i32
    %c0_i32_0 = arith.constant 0 : i32
    %c0_i32_1 = arith.constant 0 : i32
    return %c0_i32, %c0_i32_0 : i32, i32
  }
  func.func @transform_2(%arg0: i32) -> (i32, i32) {
    %c0_i32 = arith.constant 0 : i32
    %c0_i32_0 = arith.constant 0 : i32
    %c0_i32_1 = arith.constant 0 : i32
    return %c0_i32, %c0_i32_0 : i32, i32
  }
  func.func @transform_3(%arg0: i32) -> (i32, i32) {
    %c0_i32 = arith.constant 0 : i32
    %c0_i32_0 = arith.constant 0 : i32
    %c0_i32_1 = arith.constant 0 : i32
    return %c0_i32, %c0_i32_0 : i32, i32
  }
  func.func @transform_4(%arg0: i32) -> (i32, i32) {
    %c0_i32 = arith.constant 0 : i32
    %c0_i32_0 = arith.constant 0 : i32
    %c0_i32_1 = arith.constant 0 : i32
    return %c0_i32, %c0_i32_0 : i32, i32
  }
  func.func @transform_5(%arg0: i32) -> (i32, i32) {
    %c0_i32 = arith.constant 0 : i32
    %c0_i32_0 = arith.constant 0 : i32
    %c0_i32_1 = arith.constant 0 : i32
    return %c0_i32, %c0_i32_0 : i32, i32
  }
  func.func @transform_6(%arg0: i32) -> (i32, i32) {
    %c0_i32 = arith.constant 0 : i32
    %c0_i32_0 = arith.constant 0 : i32
    %c0_i32_1 = arith.constant 0 : i32
    return %c0_i32, %c0_i32_0 : i32, i32
  }
  func.func @transform_7(%arg0: i32) -> (i32, i32) {
    %c0_i32 = arith.constant 0 : i32
    %c0_i32_0 = arith.constant 0 : i32
    return %arg0, %c0_i32 : i32, i32
  }
}

</mosaic_0001>

<llo_original>
// kernel: lineard_forward.1
$region0: #{lineard_forward.1}
  #allocation0 [shape = 'u32[]', space=smem, size = 0x4, offset = 0x4, fixed_abs, tag = 'smem constant byte address 0x4 - core index']
  #allocation1 [shape = 'u32[144,128]{1,0:T(1,128)}', space=vmem, size = 0x12000, scoped, tag = 'internal scratch']
  %s0 = inlined_call_operand.hbm [shape: f32[8,16], index: 0, kind: input, shape index: {}]
  %s1 = inlined_call_operand.hbm [shape: f32[16,128], index: 1, kind: input, shape index: {}]
  %s2 = inlined_call_operand.vmem [shape: f32[1,128], index: 2, kind: input, shape index: {}]
  %s3 = inlined_call_operand.hbm [shape: f32[128,128], index: 3, kind: input, shape index: {}]
  %s4 = inlined_call_operand.vmem [shape: f32[1,128], index: 4, kind: input, shape index: {}]
  %s5 = inlined_call_operand.hbm [shape: f32[128,128], index: 5, kind: input, shape index: {}]
  %s6 = inlined_call_operand.vmem [shape: f32[1,128], index: 6, kind: input, shape index: {}]
  %s7 = inlined_call_operand.hbm [shape: f32[8,128], index: 7, kind: output, shape index: {}]
  %s8 = sld [smem:[#allocation0]]
  $region54: #{lineard_forward.1} parent=0
    _
  %s10 = ssub.s32 1, %s8
  %s11 = scalar_select 0, %s10, %s8
  $region1: #{lineard_forward.1} parent=0
    #allocation2 [shape = 'u8[4096]{0}', space=vmem, size = 0x1000, scoped, tag = 'input window, operand 0, single buffered']
    #allocation3 [shape = 's32[1]{0}', space=sflag, size = 0x4, scoped, tag = 'scoped memory for lineard_forward.1']
    #allocation4 [shape = 's32[1]{0}', space=sflag, size = 0x4, scoped, tag = 'scoped memory for lineard_forward.1']
    #allocation5 [shape = 'u8[8192]{0}', space=vmem, size = 0x2000, scoped, tag = 'input window, operand 1, single buffered']
    #allocation6 [shape = 's32[1]{0}', space=sflag, size = 0x4, scoped, tag = 'scoped memory for lineard_forward.1']
    #allocation7 [shape = 'u8[65536]{0}', space=vmem, size = 0x10000, scoped, tag = 'input window, operand 3, single buffered']
    #allocation8 [shape = 'u8[65536]{0}', space=vmem, size = 0x10000, scoped, tag = 'input window, operand 5, single buffered']
    #allocation9 [shape = 's32[1]{0}', space=sflag, size = 0x4, scoped, tag = 'scoped memory for lineard_forward.1']
    #allocation10 [shape = 'u8[4096]{0}', space=vmem, size = 0x1000, scoped, tag = 'output window, operand 0, single buffered']
    %12 = vsyncpa [#allocation3], 0
    %13 = vsyncpa [#allocation6], 0
    %14 = vsyncpa [#allocation9], 0
    %15 = vsyncpa [#allocation4], 0
    // Predicated region
    $region2: #{lineard_forward.1} parent=1 // pred_check
      _
    $region3: #{lineard_forward.1} parent=1 // pred_check_branch
      %17 = sbr.rel (0) target = $region5
    $region4: #{lineard_forward.1} parent=1 // pred_region
      %s19 = ssub.s32 128, 128
      %20 = vsyncadd [#allocation3], %s19
      %s22 = sshll.u32 [#allocation2], 4
      %s23 = int_to_ptr.vmem [resolvable:$true] %s22
      %25 = dma.hbm_to_vmem [thread:$0]  %s0, 128, %s23, [#allocation3]
    $region5: #{lineard_forward.1} parent=1 // pred_fallthru
      _
    // Predicated region
    $region6: #{lineard_forward.1} parent=1 // pred_check
      _
    $region7: #{lineard_forward.1} parent=1 // pred_check_branch
      %27 = sbr.rel (0) target = $region9
    $region8: #{lineard_forward.1} parent=1 // pred_region
      %s29 = ssub.s32 256, 256
      %30 = vsyncadd [#allocation6], %s29
      %s31 = sshll.u32 [#allocation5], 4
      %s32 = int_to_ptr.vmem [resolvable:$true] %s31
      %37 = dma.hbm_to_vmem [thread:$0]  %s1, 256, %s32, [#allocation6], 128, 128, 8
    $region9: #{lineard_forward.1} parent=1 // pred_fallthru
      _
    // Predicated region
    $region10: #{lineard_forward.1} parent=1 // pred_check
      _
    $region11: #{lineard_forward.1} parent=1 // pred_check_branch
      %39 = sbr.rel (0) target = $region13
    $region12: #{lineard_forward.1} parent=1 // pred_region
      _
    $region13: #{lineard_forward.1} parent=1 // pred_fallthru
      _
    // Predicated region
    $region14: #{lineard_forward.1} parent=1 // pred_check
      _
    $region15: #{lineard_forward.1} parent=1 // pred_check_branch
      %41 = sbr.rel (0) target = $region17
    $region16: #{lineard_forward.1} parent=1 // pred_region
      %s43 = ssub.s32 2048, 2048
      %44 = vsyncadd [#allocation6], %s43
      %s45 = sshll.u32 [#allocation7], 4
      %s46 = int_to_ptr.vmem [resolvable:$true] %s45
      %51 = dma.hbm_to_vmem [thread:$0]  %s3, 2048, %s46, [#allocation6], 128, 128, 8
    $region17: #{lineard_forward.1} parent=1 // pred_fallthru
      _
    // Predicated region
    $region18: #{lineard_forward.1} parent=1 // pred_check
      _
    $region19: #{lineard_forward.1} parent=1 // pred_check_branch
      %53 = sbr.rel (0) target = $region21
    $region20: #{lineard_forward.1} parent=1 // pred_region
      _
    $region21: #{lineard_forward.1} parent=1 // pred_fallthru
      _
    // Predicated region
    $region22: #{lineard_forward.1} parent=1 // pred_check
      _
    $region23: #{lineard_forward.1} parent=1 // pred_check_branch
      %55 = sbr.rel (0) target = $region25
    $region24: #{lineard_forward.1} parent=1 // pred_region
      %s57 = ssub.s32 2048, 2048
      %58 = vsyncadd [#allocation9], %s57
      %s59 = sshll.u32 [#allocation8], 4
      %s60 = int_to_ptr.vmem [resolvable:$true] %s59
      %65 = dma.hbm_to_vmem [thread:$0]  %s5, 2048, %s60, [#allocation9], 128, 128, 8
    $region25: #{lineard_forward.1} parent=1 // pred_fallthru
      _
    // Predicated region
    $region26: #{lineard_forward.1} parent=1 // pred_check
      _
    $region27: #{lineard_forward.1} parent=1 // pred_check_branch
      %67 = sbr.rel (0) target = $region29
    $region28: #{lineard_forward.1} parent=1 // pred_region
      _
    $region29: #{lineard_forward.1} parent=1 // pred_fallthru
      _
    // Predicated region
    $region30: #{lineard_forward.1} parent=1 // pred_check
      _
    $region31: #{lineard_forward.1} parent=1 // pred_check_branch
      %69 = sbr.rel (0) target = $region33
    $region32: #{lineard_forward.1} parent=1 // pred_region
      %70 = dma.done [#allocation3], 128
    $region33: #{lineard_forward.1} parent=1 // pred_fallthru
      _
    // Predicated region
    $region34: #{lineard_forward.1} parent=1 // pred_check
      _
    $region35: #{lineard_forward.1} parent=1 // pred_check_branch
      %72 = sbr.rel (0) target = $region37
    $region36: #{lineard_forward.1} parent=1 // pred_region
      %73 = dma.done [#allocation6], 256
    $region37: #{lineard_forward.1} parent=1 // pred_fallthru
      _
    // Predicated region
    $region38: #{lineard_forward.1} parent=1 // pred_check
      _
    $region39: #{lineard_forward.1} parent=1 // pred_check_branch
      %75 = sbr.rel (0) target = $region41
    $region40: #{lineard_forward.1} parent=1 // pred_region
      %76 = dma.done [#allocation6], 2048
    $region41: #{lineard_forward.1} parent=1 // pred_fallthru
      _
    // Predicated region
    $region42: #{lineard_forward.1} parent=1 // pred_check
      _
    $region43: #{lineard_forward.1} parent=1 // pred_check_branch
      %78 = sbr.rel (0) target = $region45
    $region44: #{lineard_forward.1} parent=1 // pred_region
      %79 = dma.done [#allocation9], 2048
    $region45: #{lineard_forward.1} parent=1 // pred_fallthru
      _
    %v80 = vld [vmem:[#allocation2] sm:$0xff]
    %v81 = vld [vmem:[#allocation5] sm:$0xff]
    %v82 = vld [vmem:[#allocation5 + $0x8] sm:$0xff]
    %v83 = vld [vmem:[%s2] sm:$0x1]
    %v85 = vlaneseq
    %v86 = vshrl.u32 %v85, 7
    %v87 = vsub.s32 0, %v86
    %v88 = vrot.slane %v83, %v87
    %vm90 = vcmask 130048
    %v92 = vsel %vm90, %v80, 0
    %94 = vmatprep.subr.mxu0 0.0
    %95 = vmatpush1.msra.mxu0 0.0
    %96 = vmatprep.subr.mxu0 0.0
    %97 = vmatpush1.msra.mxu0 0.0
    %98 = vmatprep.subr.mxu0 0.0
    %99 = vmatpush1.msra.mxu0 0.0
    %100 = vmatprep.subr.mxu0 0.0
    %101 = vmatpush1.msra.mxu0 0.0
    %102 = vmatprep.subr.mxu0 0.0
    %103 = vmatpush1.msra.mxu0 0.0
    %104 = vmatprep.subr.mxu0 0.0
    %105 = vmatpush1.msra.mxu0 0.0
    %106 = vmatprep.subr.mxu0 0.0
    %107 = vmatpush1.msra.mxu0 0.0
    %108 = vmatprep.subr.mxu0 0.0
    %109 = vmatpush1.msra.mxu0 0.0
    %110 = vmatprep.subr.mxu0 0.0
    %111 = vmatpush1.msra.mxu0 0.0
    %112 = vmatprep.subr.mxu0 0.0
    %113 = vmatpush1.msra.mxu0 0.0
    %114 = vmatprep.subr.mxu0 0.0
    %115 = vmatpush1.msra.mxu0 0.0
    %116 = vmatprep.subr.mxu0 0.0
    %117 = vmatpush1.msra.mxu0 0.0
    %118 = vmatprep.subr.mxu0 0.0
    %119 = vmatpush1.msra.mxu0 0.0
    %120 = vmatprep.subr.mxu0 0.0
    %121 = vmatpush1.msra.mxu0 0.0
    %122 = vmatprep.subr.mxu0 0.0
    %123 = vmatpush1.msra.mxu0 %v82
    %124 = vmatprep.subr.mxu0 0.0
    %125 = vmatpush1.msra.mxu0 %v81
    %126 = vmatprep.subr.mxu0 0.0
    %127 = vmatpush2.msra.mxu0 0.0
    %128 = vmatprep.subr.mxu0 0.0
    %129 = vmatpush2.msra.mxu0 0.0
    %130 = vmatprep.subr.mxu0 0.0
    %131 = vmatpush2.msra.mxu0 0.0
    %132 = vmatprep.subr.mxu0 0.0
    %133 = vmatpush2.msra.mxu0 0.0
    %134 = vmatprep.subr.mxu0 0.0
    %135 = vmatpush2.msra.mxu0 0.0
    %136 = vmatprep.subr.mxu0 0.0
    %137 = vmatpush2.msra.mxu0 0.0
    %138 = vmatprep.subr.mxu0 0.0
    %139 = vmatpush2.msra.mxu0 0.0
    %140 = vmatprep.subr.mxu0 0.0
    %141 = vmatpush2.msra.mxu0 0.0
    %142 = vmatprep.subr.mxu0 0.0
    %143 = vmatpush2.msra.mxu0 0.0
    %144 = vmatprep.subr.mxu0 0.0
    %145 = vmatpush2.msra.mxu0 0.0
    %146 = vmatprep.subr.mxu0 0.0
    %147 = vmatpush2.msra.mxu0 0.0
    %148 = vmatprep.subr.mxu0 0.0
    %149 = vmatpush2.msra.mxu0 0.0
    %150 = vmatprep.subr.mxu0 0.0
    %151 = vmatpush2.msra.mxu0 0.0
    %152 = vmatprep.subr.mxu0 0.0
    %153 = vmatpush2.msra.mxu0 0.0
    %154 = vmatprep.subr.mxu0 0.0
    %155 = vmatpush2.msra.mxu0 0.0
    %156 = vmatprep.subr.mxu0 0.0
    %157 = vmatpush2.msra.mxu0 0.0
    %158 = vmatprep.mubr.f32.mxu0 0.0
    %159 = vmatmul.mubr.f32.gmra.mxu0 %v92
    %v160 = vpop.f32.mrf.mxu0
    %v161 = vadd.f32 %v88, %v160
    %v162 = vpop.f32.mrf.mxu0
    %163 = vdwg.mxu0
    %vm164 = vcmp.gt.f32.partialorder %v161, 0.0
    %v165 = vmul.f32 %v161, 1.442695
    %v166 = vpow.pop %v165
    %v167 = vsub.f32 %v166, 1.0
    %v168 = vsel %vm164, %v161, %v167
    %v169 = vld [vmem:[#allocation7] sm:$0xff]
    %v170 = vld [vmem:[#allocation7 + $0x8] sm:$0xff]
    %v171 = vld [vmem:[#allocation7 + $0x10] sm:$0xff]
    %v172 = vld [vmem:[#allocation7 + $0x18] sm:$0xff]
    %v173 = vld [vmem:[#allocation7 + $0x20] sm:$0xff]
    %v174 = vld [vmem:[#allocation7 + $0x28] sm:$0xff]
    %v175 = vld [vmem:[#allocation7 + $0x30] sm:$0xff]
    %v176 = vld [vmem:[#allocation7 + $0x38] sm:$0xff]
    %v177 = vld [vmem:[#allocation7 + $0x40] sm:$0xff]
    %v178 = vld [vmem:[#allocation7 + $0x48] sm:$0xff]
    %v179 = vld [vmem:[#allocation7 + $0x50] sm:$0xff]
    %v180 = vld [vmem:[#allocation7 + $0x58] sm:$0xff]
    %v181 = vld [vmem:[#allocation7 + $0x60] sm:$0xff]
    %v182 = vld [vmem:[#allocation7 + $0x68] sm:$0xff]
    %v183 = vld [vmem:[#allocation7 + $0x70] sm:$0xff]
    %v184 = vld [vmem:[#allocation7 + $0x78] sm:$0xff]
    %v185 = vld [vmem:[%s4] sm:$0x1]
    %v187 = vlaneseq
    %v188 = vshrl.u32 %v187, 7
    %v189 = vsub.s32 0, %v188
    %v190 = vrot.slane %v185, %v189
    %192 = vmatprep.subr.mxu0 0.0
    %193 = vmatpush1.msra.mxu0 %v184
    %194 = vmatprep.subr.mxu0 0.0
    %195 = vmatpush1.msra.mxu0 %v183
    %196 = vmatprep.subr.mxu0 0.0
    %197 = vmatpush1.msra.mxu0 %v182
    %198 = vmatprep.subr.mxu0 0.0
    %199 = vmatpush1.msra.mxu0 %v181
    %200 = vmatprep.subr.mxu0 0.0
    %201 = vmatpush1.msra.mxu0 %v180
    %202 = vmatprep.subr.mxu0 0.0
    %203 = vmatpush1.msra.mxu0 %v179
    %204 = vmatprep.subr.mxu0 0.0
    %205 = vmatpush1.msra.mxu0 %v178
    %206 = vmatprep.subr.mxu0 0.0
    %207 = vmatpush1.msra.mxu0 %v177
    %208 = vmatprep.subr.mxu0 0.0
    %209 = vmatpush1.msra.mxu0 %v176
    %210 = vmatprep.subr.mxu0 0.0
    %211 = vmatpush1.msra.mxu0 %v175
    %212 = vmatprep.subr.mxu0 0.0
    %213 = vmatpush1.msra.mxu0 %v174
    %214 = vmatprep.subr.mxu0 0.0
    %215 = vmatpush1.msra.mxu0 %v173
    %216 = vmatprep.subr.mxu0 0.0
    %217 = vmatpush1.msra.mxu0 %v172
    %218 = vmatprep.subr.mxu0 0.0
    %219 = vmatpush1.msra.mxu0 %v171
    %220 = vmatprep.subr.mxu0 0.0
    %221 = vmatpush1.msra.mxu0 %v170
    %222 = vmatprep.subr.mxu0 0.0
    %223 = vmatpush1.msra.mxu0 %v169
    %224 = vmatprep.subr.mxu0 0.0
    %225 = vmatpush2.msra.mxu0 0.0
    %226 = vmatprep.subr.mxu0 0.0
    %227 = vmatpush2.msra.mxu0 0.0
    %228 = vmatprep.subr.mxu0 0.0
    %229 = vmatpush2.msra.mxu0 0.0
    %230 = vmatprep.subr.mxu0 0.0
    %231 = vmatpush2.msra.mxu0 0.0
    %232 = vmatprep.subr.mxu0 0.0
    %233 = vmatpush2.msra.mxu0 0.0
    %234 = vmatprep.subr.mxu0 0.0
    %235 = vmatpush2.msra.mxu0 0.0
    %236 = vmatprep.subr.mxu0 0.0
    %237 = vmatpush2.msra.mxu0 0.0
    %238 = vmatprep.subr.mxu0 0.0
    %239 = vmatpush2.msra.mxu0 0.0
    %240 = vmatprep.subr.mxu0 0.0
    %241 = vmatpush2.msra.mxu0 0.0
    %242 = vmatprep.subr.mxu0 0.0
    %243 = vmatpush2.msra.mxu0 0.0
    %244 = vmatprep.subr.mxu0 0.0
    %245 = vmatpush2.msra.mxu0 0.0
    %246 = vmatprep.subr.mxu0 0.0
    %247 = vmatpush2.msra.mxu0 0.0
    %248 = vmatprep.subr.mxu0 0.0
    %249 = vmatpush2.msra.mxu0 0.0
    %250 = vmatprep.subr.mxu0 0.0
    %251 = vmatpush2.msra.mxu0 0.0
    %252 = vmatprep.subr.mxu0 0.0
    %253 = vmatpush2.msra.mxu0 0.0
    %254 = vmatprep.subr.mxu0 0.0
    %255 = vmatpush2.msra.mxu0 0.0
    %256 = vmatprep.mubr.f32.mxu0 0.0
    %257 = vmatmul.mubr.f32.gmra.mxu0 %v168
    %v258 = vpop.f32.mrf.mxu0
    %v259 = vadd.f32 %v190, %v258
    %v260 = vpop.f32.mrf.mxu0
    %261 = vdwg.mxu0
    %vm262 = vcmp.gt.f32.partialorder %v259, 0.0
    %v263 = vmul.f32 %v259, 1.442695
    %v264 = vpow.pop %v263
    %v265 = vsub.f32 %v264, 1.0
    %v266 = vsel %vm262, %v259, %v265
    %v267 = vld [vmem:[#allocation8] sm:$0xff]
    %v268 = vld [vmem:[#allocation8 + $0x8] sm:$0xff]
    %v269 = vld [vmem:[#allocation8 + $0x10] sm:$0xff]
    %v270 = vld [vmem:[#allocation8 + $0x18] sm:$0xff]
    %v271 = vld [vmem:[#allocation8 + $0x20] sm:$0xff]
    %v272 = vld [vmem:[#allocation8 + $0x28] sm:$0xff]
    %v273 = vld [vmem:[#allocation8 + $0x30] sm:$0xff]
    %v274 = vld [vmem:[#allocation8 + $0x38] sm:$0xff]
    %v275 = vld [vmem:[#allocation8 + $0x40] sm:$0xff]
    %v276 = vld [vmem:[#allocation8 + $0x48] sm:$0xff]
    %v277 = vld [vmem:[#allocation8 + $0x50] sm:$0xff]
    %v278 = vld [vmem:[#allocation8 + $0x58] sm:$0xff]
    %v279 = vld [vmem:[#allocation8 + $0x60] sm:$0xff]
    %v280 = vld [vmem:[#allocation8 + $0x68] sm:$0xff]
    %v281 = vld [vmem:[#allocation8 + $0x70] sm:$0xff]
    %v282 = vld [vmem:[#allocation8 + $0x78] sm:$0xff]
    %v283 = vld [vmem:[%s6] sm:$0x1]
    %v285 = vlaneseq
    %v286 = vshrl.u32 %v285, 7
    %v287 = vsub.s32 0, %v286
    %v288 = vrot.slane %v283, %v287
    %290 = vmatprep.subr.mxu0 0.0
    %291 = vmatpush1.msra.mxu0 %v282
    %292 = vmatprep.subr.mxu0 0.0
    %293 = vmatpush1.msra.mxu0 %v281
    %294 = vmatprep.subr.mxu0 0.0
    %295 = vmatpush1.msra.mxu0 %v280
    %296 = vmatprep.subr.mxu0 0.0
    %297 = vmatpush1.msra.mxu0 %v279
    %298 = vmatprep.subr.mxu0 0.0
    %299 = vmatpush1.msra.mxu0 %v278
    %300 = vmatprep.subr.mxu0 0.0
    %301 = vmatpush1.msra.mxu0 %v277
    %302 = vmatprep.subr.mxu0 0.0
    %303 = vmatpush1.msra.mxu0 %v276
    %304 = vmatprep.subr.mxu0 0.0
    %305 = vmatpush1.msra.mxu0 %v275
    %306 = vmatprep.subr.mxu0 0.0
    %307 = vmatpush1.msra.mxu0 %v274
    %308 = vmatprep.subr.mxu0 0.0
    %309 = vmatpush1.msra.mxu0 %v273
    %310 = vmatprep.subr.mxu0 0.0
    %311 = vmatpush1.msra.mxu0 %v272
    %312 = vmatprep.subr.mxu0 0.0
    %313 = vmatpush1.msra.mxu0 %v271
    %314 = vmatprep.subr.mxu0 0.0
    %315 = vmatpush1.msra.mxu0 %v270
    %316 = vmatprep.subr.mxu0 0.0
    %317 = vmatpush1.msra.mxu0 %v269
    %318 = vmatprep.subr.mxu0 0.0
    %319 = vmatpush1.msra.mxu0 %v268
    %320 = vmatprep.subr.mxu0 0.0
    %321 = vmatpush1.msra.mxu0 %v267
    %322 = vmatprep.subr.mxu0 0.0
    %323 = vmatpush2.msra.mxu0 0.0
    %324 = vmatprep.subr.mxu0 0.0
    %325 = vmatpush2.msra.mxu0 0.0
    %326 = vmatprep.subr.mxu0 0.0
    %327 = vmatpush2.msra.mxu0 0.0
    %328 = vmatprep.subr.mxu0 0.0
    %329 = vmatpush2.msra.mxu0 0.0
    %330 = vmatprep.subr.mxu0 0.0
    %331 = vmatpush2.msra.mxu0 0.0
    %332 = vmatprep.subr.mxu0 0.0
    %333 = vmatpush2.msra.mxu0 0.0
    %334 = vmatprep.subr.mxu0 0.0
    %335 = vmatpush2.msra.mxu0 0.0
    %336 = vmatprep.subr.mxu0 0.0
    %337 = vmatpush2.msra.mxu0 0.0
    %338 = vmatprep.subr.mxu0 0.0
    %339 = vmatpush2.msra.mxu0 0.0
    %340 = vmatprep.subr.mxu0 0.0
    %341 = vmatpush2.msra.mxu0 0.0
    %342 = vmatprep.subr.mxu0 0.0
    %343 = vmatpush2.msra.mxu0 0.0
    %344 = vmatprep.subr.mxu0 0.0
    %345 = vmatpush2.msra.mxu0 0.0
    %346 = vmatprep.subr.mxu0 0.0
    %347 = vmatpush2.msra.mxu0 0.0
    %348 = vmatprep.subr.mxu0 0.0
    %349 = vmatpush2.msra.mxu0 0.0
    %350 = vmatprep.subr.mxu0 0.0
    %351 = vmatpush2.msra.mxu0 0.0
    %352 = vmatprep.subr.mxu0 0.0
    %353 = vmatpush2.msra.mxu0 0.0
    %354 = vmatprep.mubr.f32.mxu0 0.0
    %355 = vmatmul.mubr.f32.gmra.mxu0 %v266
    %v356 = vpop.f32.mrf.mxu0
    %v357 = vadd.f32 %v288, %v356
    %v358 = vpop.f32.mrf.mxu0
    %359 = vdwg.mxu0
    %v360 = vmul.f32 %v357, 0.5
    %v361 = vtanh.pop %v360
    %v362 = vmul.f32 %v361, 0.5
    %v363 = vadd.f32 %v362, 0.5
    %364 = vst [vmem:[#allocation10] sm:$0xff] %v363
    // Predicated region
    $region46: #{lineard_forward.1} parent=1 // pred_check
      _
    $region47: #{lineard_forward.1} parent=1 // pred_check_branch
      %366 = sbr.rel (0) target = $region49
    $region48: #{lineard_forward.1} parent=1 // pred_region
      %s368 = ssub.s32 128, 128
      %369 = vsyncadd [#allocation4], %s368
      %s371 = sshll.u32 [#allocation10], 4
      %s372 = int_to_ptr.vmem [resolvable:$true] %s371
      %374 = dma.vmem_to_hbm [thread:$0]  %s372, 128, %s7, [#allocation4]
    $region49: #{lineard_forward.1} parent=1 // pred_fallthru
      _
    // Predicated region
    $region50: #{lineard_forward.1} parent=1 // pred_check
      _
    $region51: #{lineard_forward.1} parent=1 // pred_check_branch
      %376 = sbr.rel (0) target = $region53
    $region52: #{lineard_forward.1} parent=1 // pred_region
      %377 = dma.done [#allocation4], 128
    $region53: #{lineard_forward.1} parent=1 // pred_fallthru
      _
    %378 = vsyncpa [#allocation3], 1
    %379 = vsyncpa [#allocation6], 1
    %380 = vsyncpa [#allocation9], 1
    %381 = vsyncpa [#allocation4], 1

</llo_original>
